<compile_context>
chip_gen: v7x
topology: tpu7x:2x2x1
jax: 0.10.0
libtpu: 0.0.40
codegen_flags: <defaults>
</compile_context>

<pallas_src>
import functools

import numpy as np
import jax
import jax.numpy as jnp
from jax import lax
from jax.experimental import pallas as pl
from jax.experimental.pallas import tpu as pltpu

NUM_CLASSES = 36
LANES = 128
N_PAIR_LANES = 128      # max matched (src, tgt) pairs per head; pairs live on lanes
MAX_ROW_TILE = 2048     # rows of 128 lanes per grid step
PAD_LOGIT = -1e9        # sigmoid -> 0, BCE(x,0) -> 0  =>  exactly zero loss contribution


def _pow(x, gamma):
    # exact repeated-multiply for small integer exponents (gamma=2.0 default)
    if float(gamma) == int(gamma) and 0 <= int(gamma) <= 4:
        out = jnp.ones_like(x)
        for _ in range(int(gamma)):
            out = out * x
        return out
    return x ** gamma


# --------------------------------------------------------------------------- kernel
def _criterion_kernel(logits_ref, srcq_ref, tgtq_ref, aux_ref, out_ref, acc_ref,
                      *, alpha, gamma):
    # grid = (head, row_tile). head axis "parallel", row axis is a reduction.
    # logits_ref: (tile_m, 128) lane-packed logits (padded with PAD_LOGIT)
    # srcq_ref/tgtq_ref: (8, 128) matched quads, coords on sublanes, pairs on lanes
    # aux_ref: (8, 128), row 0 = matched logits, row 1 = pair-valid mask
    # out_ref: (8, 128), row 0 lanes 0..3 = [focal_sum, vfl_sum, l1_sum, giou_sum]
    t = pl.program_id(1)

    @pl.when(t == 0)
    def _init():
        acc_ref[...] = jnp.zeros_like(acc_ref)

    # ---------- bulk term (as if every element had target = 0, score = 0) --------
    # base = sigmoid(x)^gamma * BCE(x, 0);  focal_base = (1-alpha)*base,
    # vfl_base = alpha*base  =>  only ONE running sum is needed.
    x = logits_ref[...].astype(jnp.float32)
    abs_x = jnp.abs(x)
    e = jnp.exp(-abs_x)
    log1pe = jnp.log1p(e)
    inv1pe = pl.reciprocal(1.0 + e, approx=True)
    p = jnp.where(x >= 0.0, inv1pe, e * inv1pe)          # sigmoid(x)
    bce0 = jnp.maximum(x, 0.0) + log1pe                  # BCE-with-logits(x, 0)
    base = _pow(p, gamma) * bce0                         # padded elems contribute 0
    acc_ref[...] += jnp.sum(base, axis=0, keepdims=True)  # (1, 128) partial, XLU reduce

    @pl.when(t == pl.num_programs(1) - 1)
    def _final():
        base_sum = jnp.sum(acc_ref[...], keepdims=True)  # (1, 1)

        # ---------- matched-pair work: quads losses + sparse cls corrections -----
        s = srcq_ref[...]                                # (8, 128)
        tq = tgtq_ref[...]
        a = aux_ref[...]
        xl = a[0:1, :]                                   # matched logits   (1, 128)
        m = a[1:2, :]                                    # pair-valid mask  (1, 128)

        # L1 loss (reduction='none').sum() over valid matched pairs
        l1_sum = jnp.sum(jnp.abs(s - tq) * m, keepdims=True)

        def to_xyxy(q):                                  # quad -> axis-aligned bbox
            xs = [q[i:i + 1, :] for i in (0, 2, 4, 6)]
            ys = [q[i:i + 1, :] for i in (1, 3, 5, 7)]
            xmin = jnp.minimum(jnp.minimum(xs[0], xs[1]), jnp.minimum(xs[2], xs[3]))
            xmax = jnp.maximum(jnp.maximum(xs[0], xs[1]), jnp.maximum(xs[2], xs[3]))
            ymin = jnp.minimum(jnp.minimum(ys[0], ys[1]), jnp.minimum(ys[2], ys[3]))
            ymax = jnp.maximum(jnp.maximum(ys[0], ys[1]), jnp.maximum(ys[2], ys[3]))
            return xmin, ymin, xmax, ymax

        sx0, sy0, sx1, sy1 = to_xyxy(s)
        tx0, ty0, tx1, ty1 = to_xyxy(tq)
        area_s = (sx1 - sx0) * (sy1 - sy0)
        area_t = (tx1 - tx0) * (ty1 - ty0)
        iw = jnp.maximum(jnp.minimum(sx1, tx1) - jnp.maximum(sx0, tx0), 0.0)
        ih = jnp.maximum(jnp.minimum(sy1, ty1) - jnp.maximum(sy0, ty0), 0.0)
        inter = iw * ih
        union = area_s + area_t - inter
        iou = jnp.where(union > 0.0, inter / union, 0.0)
        ew = jnp.maximum(sx1, tx1) - jnp.minimum(sx0, tx0)
        eh = jnp.maximum(sy1, ty1) - jnp.minimum(sy0, ty0)
        enclose = ew * eh
        giou = jnp.where(enclose > 0.0, iou - (enclose - union) / enclose, iou)
        giou_sum = jnp.sum(giou * m, keepdims=True)

        # sparse cls corrections at the <=128 matched (b, q, label) elements
        ts = iou * m                                     # VFL target score (masked)
        axl = jnp.abs(xl)
        el = jnp.exp(-axl)
        log1pel = jnp.log1p(el)
        invl = pl.reciprocal(1.0 + el, approx=True)
        pm = jnp.where(xl >= 0.0, invl, el * invl)       # sigmoid(matched logits)
        relu_l = jnp.maximum(xl, 0.0)
        bce0_l = relu_l + log1pel                        # BCE(xl, 0)
        bce1_l = relu_l - xl + log1pel                   # BCE(xl, 1)
        base_l = _pow(pm, gamma) * bce0_l
        # focal at t==1: alpha*BCE(x,1)*(1-p)^g   (replace the base contribution)
        focal_corr = alpha * bce1_l * _pow(1.0 - pm, gamma) - (1.0 - alpha) * base_l
        # TODO(synk): torch detaches sigmoid(logits) and the IoU target inside the VFL
        # weight; forward value identical, only matters for autodiff (not implemented).
        bce_ts_l = relu_l - xl * ts + log1pel            # BCE(xl, ts)
        vfl_corr = ts * bce_ts_l - alpha * base_l
        focal_corr_sum = jnp.sum(focal_corr * m, keepdims=True)
        vfl_corr_sum = jnp.sum(vfl_corr * m, keepdims=True)

        focal_sum = (1.0 - alpha) * base_sum + focal_corr_sum
        vfl_sum = alpha * base_sum + vfl_corr_sum

        # lane-dense (8, 128) output block; row 0 lanes 0..3 carry the four sums
        row = lax.broadcasted_iota(jnp.int32, (8, LANES), 0)
        lane = lax.broadcasted_iota(jnp.int32, (8, LANES), 1)
        r0 = row == 0
        zeros = jnp.zeros((8, LANES), jnp.float32)
        out_ref[...] = jnp.where(r0 & (lane == 0), focal_sum,
                       jnp.where(r0 & (lane == 1), vfl_sum,
                       jnp.where(r0 & (lane == 2), l1_sum,
                       jnp.where(r0 & (lane == 3), giou_sum, zeros))))


# --------------------------------------------------------------------------- wrapper
def _plan_lane_packing(n_elems):
    rows = -(-n_elems // LANES)
    rows = ((rows + 15) // 16) * 16           # 16-sublane friendly (bf16-safe)
    if rows <= MAX_ROW_TILE:
        return rows, rows                     # one tile per head (common case)
    n_tiles = -(-rows // MAX_ROW_TILE)
    tile_m = ((-(-rows // n_tiles) + 15) // 16) * 16
    return n_tiles * tile_m, tile_m


def criterion_losses_pallas(logits_slab, srcq, tgtq, aux, alpha, gamma, tile_m):
    # logits_slab: [L, rows, 128]; srcq/tgtq/aux: [L, 8, 128]
    L, rows, lanes = logits_slab.shape
    assert lanes == LANES and rows % tile_m == 0 and tile_m % 8 == 0
    kernel = functools.partial(_criterion_kernel, alpha=float(alpha), gamma=float(gamma))
    return pl.pallas_call(
        kernel,
        out_shape=jax.ShapeDtypeStruct((L, 8, LANES), jnp.float32),
        grid_spec=pltpu.PrefetchScalarGridSpec(
            num_scalar_prefetch=0,
            grid=(L, rows // tile_m),
            in_specs=[
                pl.BlockSpec((None, tile_m, LANES), lambda h, t: (h, t, 0)),
                pl.BlockSpec((None, 8, LANES), lambda h, t: (h, 0, 0)),
                pl.BlockSpec((None, 8, LANES), lambda h, t: (h, 0, 0)),
                pl.BlockSpec((None, 8, LANES), lambda h, t: (h, 0, 0)),
            ],
            out_specs=pl.BlockSpec((None, 8, LANES), lambda h, t: (h, 0, 0)),
            scratch_shapes=[pltpu.VMEM((1, LANES), jnp.float32)],
        ),
        compiler_params=pltpu.CompilerParams(
            dimension_semantics=("parallel", "arbitrary")),
    )(logits_slab, srcq, tgtq, aux)


# --------------------------------------------------------------------------- host glue
def get_cdn_matched_indices(dn_meta, targets):
    dn_positive_idx, dn_num_group = dn_meta['dn_positive_idx'], dn_meta['dn_num_group']
    indices = []
    for i, t in enumerate(targets):
        num_gt = len(t['labels'])
        if num_gt > 0:
            gt_idx = np.tile(np.arange(num_gt, dtype=np.int64), dn_num_group)
            assert len(dn_positive_idx[i]) == len(gt_idx)
            indices.append((np.asarray(dn_positive_idx[i], np.int64), gt_idx))
        else:
            indices.append((np.zeros(0, np.int64), np.zeros(0, np.int64)))
    return indices


def simple_greedy_matcher(outputs, targets):
    # TODO(synk): the Hungarian matcher is an injected dependency of the module;
    # replaced by a deterministic greedy L1-quad-cost matcher (host glue, not a kernel).
    pred_quads = np.asarray(outputs['pred_quads'])
    indices = []
    for b, t in enumerate(targets):
        ngt = len(t['labels'])
        if ngt == 0:
            indices.append((np.zeros(0, np.int64), np.zeros(0, np.int64)))
            continue
        cost = np.abs(pred_quads[b][:, None, :] - np.asarray(t['quads'])[None, :, :]).sum(-1)
        used, src = set(), np.zeros(ngt, np.int64)
        for j in range(ngt):
            col = cost[:, j].copy()
            for u in used:
                col[u] = np.inf
            i = int(np.argmin(col))
            used.add(i)
            src[j] = i
        indices.append((src, np.arange(ngt, dtype=np.int64)))
    return indices


def _get_src_permutation_idx(indices):
    batch_idx = np.concatenate([np.full(len(s), i, np.int64) for i, (s, _) in enumerate(indices)])
    src_idx = np.concatenate([np.asarray(s, np.int64) for s, _ in indices])
    return batch_idx, src_idx


def _pair_arrays_np(targets, indices, n_pad=N_PAIR_LANES):
    # host-side (tiny) pair metadata for one head
    batch_idx, src_idx = _get_src_permutation_idx(indices)
    n = int(len(src_idx))
    assert n <= n_pad, "increase N_PAIR_LANES"
    b_pad = np.zeros(n_pad, np.int32)
    s_pad = np.zeros(n_pad, np.int32)
    lab_pad = np.zeros(n_pad, np.int32)
    tgt_pad = np.zeros((n_pad, 8), np.float32)
    mask = np.zeros(n_pad, np.float32)
    if n:
        b_pad[:n] = batch_idx
        s_pad[:n] = src_idx
        lab_pad[:n] = np.concatenate(
            [np.asarray(t['labels'], np.int64)[np.asarray(j, np.int64)]
             for t, (_, j) in zip(targets, indices)])
        tgt_pad[:n] = np.concatenate(
            [np.asarray(t['quads'], np.float32)[np.asarray(j, np.int64)]
             for t, (_, j) in zip(targets, indices)], axis=0)
        mask[:n] = 1.0
    return b_pad, s_pad, lab_pad, tgt_pad, mask


def _build_device_inputs(head_outputs, targets, head_indices):
    # Builds, ONCE for all heads (no per-head HBM re-materialization of [B,Q,C] aux
    # streams): lane-packed logits slab + tiny [8,128] pair blocks per head.
    L = len(head_outputs)
    B, Q, C = head_outputs[0]['pred_logits'].shape
    n_valid = B * Q * C
    rows, tile_m = _plan_lane_packing(n_valid)

    bpad = np.zeros((L, N_PAIR_LANES), np.int32)
    spad = np.zeros((L, N_PAIR_LANES), np.int32)
    lpad = np.zeros((L, N_PAIR_LANES), np.int32)
    tpad = np.zeros((L, N_PAIR_LANES, 8), np.float32)
    mpad = np.zeros((L, N_PAIR_LANES), np.float32)
    for hi, indices in enumerate(head_indices):
        bpad[hi], spad[hi], lpad[hi], tpad[hi], mpad[hi] = _pair_arrays_np(targets, indices)

    logits_all = jnp.stack([jnp.asarray(h['pred_logits']) for h in head_outputs])   # [L,B,Q,C]
    quads_all = jnp.stack([jnp.asarray(h['pred_quads']).astype(jnp.float32)
                           for h in head_outputs])                                  # [L,B,Q,8]

    # lane-dense logits slab (kept in the incoming dtype; kernel upcasts in-register);
    # padded with PAD_LOGIT so padded elements contribute exactly 0 (no mask stream).
    flat = logits_all.reshape(L, n_valid)
    flat = jnp.pad(flat, ((0, 0), (0, rows * LANES - n_valid)), constant_values=PAD_LOGIT)
    logits_slab = flat.reshape(L, rows, LANES)

    # two batched device gathers for all heads' matched pairs (no host sync)
    hsel = jnp.arange(L)[:, None]
    b_j, s_j, lab_j = jnp.asarray(bpad), jnp.asarray(spad), jnp.asarray(lpad)
    src_sel = quads_all[hsel, b_j, s_j]                                    # [L,128,8]
    logit_sel = logits_all[hsel, b_j, s_j, lab_j].astype(jnp.float32)      # [L,128]
    srcq = jnp.transpose(src_sel, (0, 2, 1))                               # [L,8,128]
    tgtq = jnp.asarray(np.transpose(tpad, (0, 2, 1)))                      # [L,8,128]
    aux = jnp.concatenate([logit_sel[:, None, :],
                           jnp.asarray(mpad)[:, None, :],
                           jnp.zeros((L, 6, N_PAIR_LANES), jnp.float32)], axis=1)
    return logits_slab, srcq, tgtq, aux, tile_m


# --------------------------------------------------------------------------- criterion
class SetQuadCriterionPallas:
    def __init__(self, matcher, aux_loss_weight_dict, alpha=0.2, gamma=2.0,
                 eos_coef=1e-4, num_classes=NUM_CLASSES):
        self.num_classes = num_classes
        self.matcher = matcher
        # NOTE: the torch reference indexes this dict both by loss-type and by the
        # returned loss-name keys; here it is keyed by the returned loss names.
        self.aux_loss_weight_dict = aux_loss_weight_dict
        self.alpha = alpha
        self.gamma = gamma
        ew = np.ones(num_classes + 1, np.float32)
        ew[-1] = eos_coef
        self.empty_weight = ew  # registered buffer (unused by the implemented losses)

    @property
    def supported_aux_losses(self):
        return ('focal', 'vfl', 'quads')

    def _prepare_heads(self, outputs, targets):
        heads = []
        outputs_without_aux = {k: v for k, v in outputs.items() if 'aux' not in k}
        indices = self.matcher(outputs_without_aux, targets)
        num_quads = max(1, sum(len(t['labels']) for t in targets))
        heads.append(dict(out=outputs, indices=indices, num_quads=num_quads, suffix=''))
        if 'aux_outputs' in outputs:
            for i, aux in enumerate(outputs['aux_outputs']):
                heads.append(dict(out=aux, indices=self.matcher(aux, targets),
                                  num_quads=num_quads, suffix=f'_aux_{i}'))
        if 'dn_aux_outputs' in outputs:
            assert 'dn_meta' in outputs
            dn_indices = get_cdn_matched_indices(outputs['dn_meta'], targets)
            dn_num_quads = num_quads * outputs['dn_meta']['dn_num_group']
            for i, aux in enumerate(outputs['dn_aux_outputs']):
                heads.append(dict(out=aux, indices=dn_indices,
                                  num_quads=dn_num_quads, suffix=f'_dn_{i}'))
        return heads

    def forward(self, outputs, targets):
        heads = self._prepare_heads(outputs, targets)
        B, Q, C = outputs['pred_logits'].shape
        assert C == self.num_classes

        logits_slab, srcq, tgtq, aux, tile_m = _build_device_inputs(
            [h['out'] for h in heads], targets, [h['indices'] for h in heads])
        sums = criterion_losses_pallas(logits_slab, srcq, tgtq, aux,
                                       self.alpha, self.gamma, tile_m)   # [L, 8, 128]

        aux_losses = {}
        w = self.aux_loss_weight_dict
        for hi, h in enumerate(heads):
            nq = h['num_quads']
            sfx = h['suffix']
            # focal/vfl: loss.mean(1).sum() * Q / num_quads == total_sum / num_quads
            # giou: matches the torch reference literally: 1 - sum(giou)/num_quads
            per_head = {
                'loss_labels_focal': sums[hi, 0, 0] / nq,
                'loss_vfl': sums[hi, 0, 1] / nq,
                'loss_quad': sums[hi, 0, 2] / nq,
                'loss_giou': 1.0 - sums[hi, 0, 3] / nq,
            }
            for k, v in per_head.items():
                if k in w:
                    aux_losses[k + sfx] = v * w[k]
        return aux_losses

    # ------------------------------------------------------------------ API-compat shims
    def _single_head_losses(self, outputs, targets, indices, num_quads):
        logits_slab, srcq, tgtq, aux, tile_m = _build_device_inputs(
            [outputs], targets, [indices])
        s = criterion_losses_pallas(logits_slab, srcq, tgtq, aux,
                                    self.alpha, self.gamma, tile_m)
        return {'loss_labels_focal': s[0, 0, 0] / num_quads,
                'loss_vfl': s[0, 0, 1] / num_quads,
                'loss_quad': s[0, 0, 2] / num_quads,
                'loss_giou': 1.0 - s[0, 0, 3] / num_quads}

    def get_aux_loss(self, loss_type, outputs, targets, indices, num_quads):
        all_losses = self._single_head_losses(outputs, targets, indices, num_quads)
        keys = {'focal': ('loss_labels_focal',), 'vfl': ('loss_vfl',),
                'quads': ('loss_quad', 'loss_giou')}[loss_type]
        return {k: all_losses[k] for k in keys}


# --------------------------------------------------------------------------- demo
if __name__ == "__main__":
    key = jax.random.PRNGKey(0)
    B, Q, C = 2, 8, NUM_CLASSES
    k1, k2, k3, k4, k5, k6, k7, k8 = jax.random.split(key, 8)

    pred_logits = jax.random.normal(k1, (B, Q, C), jnp.float32)
    pred_quads = jax.random.uniform(k2, (B, Q, 8), jnp.float32)
    aux_logits = jax.random.normal(k3, (B, Q, C), jnp.float32)
    aux_quads = jax.random.uniform(k4, (B, Q, 8), jnp.float32)
    dn_logits = jax.random.normal(k5, (B, Q, C), jnp.float32)
    dn_quads = jax.random.uniform(k6, (B, Q, 8), jnp.float32)

    targets = [
        {'labels': np.array([1, 5, 7], np.int64),
         'quads': np.asarray(jax.random.uniform(k7, (3, 8), jnp.float32))},
        {'labels': np.array([2, 9], np.int64),
         'quads': np.asarray(jax.random.uniform(k8, (2, 8), jnp.float32))},
    ]

    dn_meta = {
        'dn_num_group': 2,
        'dn_positive_idx': [np.array([0, 1, 2, 4, 5, 6], np.int64),
                            np.array([0, 1, 4, 5], np.int64)],
    }

    outputs = {
        'pred_logits': pred_logits,
        'pred_quads': pred_quads,
        'aux_outputs': [{'pred_logits': aux_logits, 'pred_quads': aux_quads}],
        'dn_aux_outputs': [{'pred_logits': dn_logits, 'pred_quads': dn_quads}],
        'dn_meta': dn_meta,
    }

    weights = {'loss_labels_focal': 1.0, 'loss_vfl': 1.0, 'loss_quad': 5.0, 'loss_giou': 2.0}
    criterion = SetQuadCriterionPallas(matcher=simple_greedy_matcher,
                                       aux_loss_weight_dict=weights)

    losses = criterion.forward(outputs, targets)
    for v in losses.values():
        jax.block_until_ready(v)
    print("KERNEL_OK")
</pallas_src>

<mosaic_0001>
module attributes {stable_mosaic.version = 11 : i64} {
  func.func @_criterion_kernel(%arg0: i32, %arg1: i32, %arg2: memref<1x16x128xf32, #tpu.memory_space<vmem>>, %arg3: memref<1x8x128xf32, #tpu.memory_space<vmem>>, %arg4: memref<1x8x128xf32, #tpu.memory_space<vmem>>, %arg5: memref<1x8x128xf32, #tpu.memory_space<vmem>>, %arg6: memref<1x8x128xf32, #tpu.memory_space<vmem>>, %arg7: memref<1x128xf32, #tpu.memory_space<vmem>>) attributes {dimension_semantics = [#tpu.dimension_semantics<parallel>, #tpu.dimension_semantics<arbitrary>], iteration_bounds = array<i64: 3, 1>, scalar_prefetch = 0 : i64, scratch_operands = 1 : i64, tpu.core_type = #tpu.core_type<tc>, window_params = [{transform_indices = @transform_0, window_bounds = array<i64: 1, 16, 128>}, {transform_indices = @transform_1, window_bounds = array<i64: 1, 8, 128>}, {transform_indices = @transform_2, window_bounds = array<i64: 1, 8, 128>}, {transform_indices = @transform_3, window_bounds = array<i64: 1, 8, 128>}, {transform_indices = @transform_4, window_bounds = array<i64: 1, 8, 128>}]} {
    %c0_i32 = arith.constant 0 : i32
    %0 = arith.cmpi eq, %arg1, %c0_i32 : i32
    %1 = arith.extui %0 : i1 to i32
    %c0_i32_0 = arith.constant 0 : i32
    %2 = arith.cmpi ne, %1, %c0_i32_0 : i32
    scf.if %2 {
      %cst_14 = arith.constant 0.000000e+00 : f32
      %32 = vector.broadcast %cst_14 : f32 to vector<1x128xf32>
      %c0_15 = arith.constant 0 : index
      %c0_16 = arith.constant 0 : index
      %33 = vector.load %arg7[%c0_15, %c0_16] : memref<1x128xf32, #tpu.memory_space<vmem>>, vector<1x128xf32>
      tpu.vector_store %arg7[%c0_15, %c0_16], %32 {strides = array<i32>} : memref<1x128xf32, #tpu.memory_space<vmem>>, vector<1x128xf32>,
    } else {
    }
    %c0 = arith.constant 0 : index
    %c0_1 = arith.constant 0 : index
    %c0_2 = arith.constant 0 : index
    %3 = vector.load %arg2[%c0, %c0_1, %c0_2] : memref<1x16x128xf32, #tpu.memory_space<vmem>>, vector<1x16x128xf32>
    %4 = vector.shape_cast %3 : vector<1x16x128xf32> to vector<16x128xf32>
    %5 = math.absf %4 : vector<16x128xf32>
    %cst = arith.constant 0.000000e+00 : f32
    %6 = vector.broadcast %cst : f32 to vector<16x128xf32>
    %7 = arith.subf %6, %5 : vector<16x128xf32>
    %8 = math.exp %7 : vector<16x128xf32>
    %9 = math.log1p %8 : vector<16x128xf32>
    %cst_3 = arith.constant 1.000000e+00 : f32
    %10 = vector.broadcast %cst_3 : f32 to vector<16x128xf32>
    %11 = arith.addf %10, %8 : vector<16x128xf32>
    %12 = tpu.reciprocal %11 {approx = true} : vector<16x128xf32> -> vector<16x128xf32>
    %cst_4 = arith.constant 0.000000e+00 : f32
    %13 = vector.broadcast %cst_4 : f32 to vector<16x128xf32>
    %14 = arith.cmpf oge, %4, %13 : vector<16x128xf32>
    %15 = arith.mulf %8, %12 : vector<16x128xf32>
    %16 = arith.select %14, %12, %15 : vector<16x128xi1>, vector<16x128xf32>
    %cst_5 = arith.constant 0.000000e+00 : f32
    %17 = vector.broadcast %cst_5 : f32 to vector<16x128xf32>
    %18 = arith.maximumf %4, %17 : vector<16x128xf32>
    %19 = arith.addf %18, %9 : vector<16x128xf32>
    %cst_6 = arith.constant 1.000000e+00 : f32
    %20 = vector.broadcast %cst_6 : f32 to vector<16x128xf32>
    %21 = arith.mulf %20, %16 : vector<16x128xf32>
    %22 = arith.mulf %21, %16 : vector<16x128xf32>
    %23 = arith.mulf %22, %19 : vector<16x128xf32>
    %c0_7 = arith.constant 0 : index
    %c0_8 = arith.constant 0 : index
    %24 = vector.load %arg7[%c0_7, %c0_8] : memref<1x128xf32, #tpu.memory_space<vmem>>, vector<1x128xf32>
    %cst_9 = arith.constant dense<0.000000e+00> : vector<128xf32>
    %25 = vector.multi_reduction <add>, %23, %cst_9 [0] : vector<16x128xf32> to vector<128xf32>
    %26 = vector.shape_cast %25 : vector<128xf32> to vector<1x128xf32>
    %27 = arith.addf %24, %26 : vector<1x128xf32>
    %c0_10 = arith.constant 0 : index
    %c0_11 = arith.constant 0 : index
    %28 = vector.load %arg7[%c0_10, %c0_11] : memref<1x128xf32, #tpu.memory_space<vmem>>, vector<1x128xf32>
    tpu.vector_store %arg7[%c0_10, %c0_11], %27 {strides = array<i32>} : memref<1x128xf32, #tpu.memory_space<vmem>>, vector<1x128xf32>,
    %c0_i32_12 = arith.constant 0 : i32
    %29 = arith.cmpi eq, %arg1, %c0_i32_12 : i32
    %30 = arith.extui %29 : i1 to i32
    %c0_i32_13 = arith.constant 0 : i32
    %31 = arith.cmpi ne, %30, %c0_i32_13 : i32
    scf.if %31 {
      %c0_14 = arith.constant 0 : index
      %c0_15 = arith.constant 0 : index
      %32 = vector.load %arg7[%c0_14, %c0_15] : memref<1x128xf32, #tpu.memory_space<vmem>>, vector<1x128xf32>
      %33 = vector.shape_cast %32 : vector<1x128xf32> to vector<1x1x128xf32>
      %cst_16 = arith.constant dense<0.000000e+00> : vector<1xf32>
      %34 = vector.multi_reduction <add>, %33, %cst_16 [1, 2] : vector<1x1x128xf32> to vector<1xf32>
      %35 = vector.shape_cast %34 : vector<1xf32> to vector<1x1x1xf32>
      %36 = vector.extract %35[0, 0, 0] : f32 from vector<1x1x1xf32>
      %37 = vector.broadcast %36 : f32 to vector<1x1xf32>
      %c0_17 = arith.constant 0 : index
      %c0_18 = arith.constant 0 : index
      %c0_19 = arith.constant 0 : index
      %38 = vector.load %arg3[%c0_17, %c0_18, %c0_19] : memref<1x8x128xf32, #tpu.memory_space<vmem>>, vector<1x8x128xf32>
      %39 = vector.shape_cast %38 : vector<1x8x128xf32> to vector<8x128xf32>
      %c0_20 = arith.constant 0 : index
      %c0_21 = arith.constant 0 : index
      %c0_22 = arith.constant 0 : index
      %40 = vector.load %arg4[%c0_20, %c0_21, %c0_22] : memref<1x8x128xf32, #tpu.memory_space<vmem>>, vector<1x8x128xf32>
      %41 = vector.shape_cast %40 : vector<1x8x128xf32> to vector<8x128xf32>
      %c0_23 = arith.constant 0 : index
      %c0_24 = arith.constant 0 : index
      %c0_25 = arith.constant 0 : index
      %42 = vector.load %arg5[%c0_23, %c0_24, %c0_25] : memref<1x8x128xf32, #tpu.memory_space<vmem>>, vector<1x8x128xf32>
      %43 = vector.shape_cast %42 : vector<1x8x128xf32> to vector<8x128xf32>
      %44 = vector.extract_strided_slice %43 {offsets = [0, 0], sizes = [1, 128], strides = [1, 1]} : vector<8x128xf32> to vector<1x128xf32>
      %45 = vector.extract_strided_slice %43 {offsets = [1, 0], sizes = [1, 128], strides = [1, 1]} : vector<8x128xf32> to vector<1x128xf32>
      %46 = arith.subf %39, %41 : vector<8x128xf32>
      %47 = math.absf %46 : vector<8x128xf32>
      %48 = vector.broadcast %45 : vector<1x128xf32> to vector<8x128xf32>
      %49 = arith.mulf %47, %48 : vector<8x128xf32>
      %50 = vector.shape_cast %49 : vector<8x128xf32> to vector<1x8x128xf32>
      %cst_26 = arith.constant dense<0.000000e+00> : vector<1xf32>
      %51 = vector.multi_reduction <add>, %50, %cst_26 [1, 2] : vector<1x8x128xf32> to vector<1xf32>
      %52 = vector.shape_cast %51 : vector<1xf32> to vector<1x1x1xf32>
      %53 = vector.extract %52[0, 0, 0] : f32 from vector<1x1x1xf32>
      %54 = vector.broadcast %53 : f32 to vector<1x1xf32>
      %55 = vector.extract_strided_slice %39 {offsets = [0, 0], sizes = [1, 128], strides = [1, 1]} : vector<8x128xf32> to vector<1x128xf32>
      %56 = vector.extract_strided_slice %39 {offsets = [2, 0], sizes = [1, 128], strides = [1, 1]} : vector<8x128xf32> to vector<1x128xf32>
      %57 = vector.extract_strided_slice %39 {offsets = [4, 0], sizes = [1, 128], strides = [1, 1]} : vector<8x128xf32> to vector<1x128xf32>
      %58 = vector.extract_strided_slice %39 {offsets = [6, 0], sizes = [1, 128], strides = [1, 1]} : vector<8x128xf32> to vector<1x128xf32>
      %59 = vector.extract_strided_slice %39 {offsets = [1, 0], sizes = [1, 128], strides = [1, 1]} : vector<8x128xf32> to vector<1x128xf32>
      %60 = vector.extract_strided_slice %39 {offsets = [3, 0], sizes = [1, 128], strides = [1, 1]} : vector<8x128xf32> to vector<1x128xf32>
      %61 = vector.extract_strided_slice %39 {offsets = [5, 0], sizes = [1, 128], strides = [1, 1]} : vector<8x128xf32> to vector<1x128xf32>
      %62 = vector.extract_strided_slice %39 {offsets = [7, 0], sizes = [1, 128], strides = [1, 1]} : vector<8x128xf32> to vector<1x128xf32>
      %63 = arith.minimumf %55, %56 : vector<1x128xf32>
      %64 = arith.minimumf %57, %58 : vector<1x128xf32>
      %65 = arith.minimumf %63, %64 : vector<1x128xf32>
      %66 = arith.maximumf %55, %56 : vector<1x128xf32>
      %67 = arith.maximumf %57, %58 : vector<1x128xf32>
      %68 = arith.maximumf %66, %67 : vector<1x128xf32>
      %69 = arith.minimumf %59, %60 : vector<1x128xf32>
      %70 = arith.minimumf %61, %62 : vector<1x128xf32>
      %71 = arith.minimumf %69, %70 : vector<1x128xf32>
      %72 = arith.maximumf %59, %60 : vector<1x128xf32>
      %73 = arith.maximumf %61, %62 : vector<1x128xf32>
      %74 = arith.maximumf %72, %73 : vector<1x128xf32>
      %75 = vector.extract_strided_slice %41 {offsets = [0, 0], sizes = [1, 128], strides = [1, 1]} : vector<8x128xf32> to vector<1x128xf32>
      %76 = vector.extract_strided_slice %41 {offsets = [2, 0], sizes = [1, 128], strides = [1, 1]} : vector<8x128xf32> to vector<1x128xf32>
      %77 = vector.extract_strided_slice %41 {offsets = [4, 0], sizes = [1, 128], strides = [1, 1]} : vector<8x128xf32> to vector<1x128xf32>
      %78 = vector.extract_strided_slice %41 {offsets = [6, 0], sizes = [1, 128], strides = [1, 1]} : vector<8x128xf32> to vector<1x128xf32>
      %79 = vector.extract_strided_slice %41 {offsets = [1, 0], sizes = [1, 128], strides = [1, 1]} : vector<8x128xf32> to vector<1x128xf32>
      %80 = vector.extract_strided_slice %41 {offsets = [3, 0], sizes = [1, 128], strides = [1, 1]} : vector<8x128xf32> to vector<1x128xf32>
      %81 = vector.extract_strided_slice %41 {offsets = [5, 0], sizes = [1, 128], strides = [1, 1]} : vector<8x128xf32> to vector<1x128xf32>
      %82 = vector.extract_strided_slice %41 {offsets = [7, 0], sizes = [1, 128], strides = [1, 1]} : vector<8x128xf32> to vector<1x128xf32>
      %83 = arith.minimumf %75, %76 : vector<1x128xf32>
      %84 = arith.minimumf %77, %78 : vector<1x128xf32>
      %85 = arith.minimumf %83, %84 : vector<1x128xf32>
      %86 = arith.maximumf %75, %76 : vector<1x128xf32>
      %87 = arith.maximumf %77, %78 : vector<1x128xf32>
      %88 = arith.maximumf %86, %87 : vector<1x128xf32>
      %89 = arith.minimumf %79, %80 : vector<1x128xf32>
      %90 = arith.minimumf %81, %82 : vector<1x128xf32>
      %91 = arith.minimumf %89, %90 : vector<1x128xf32>
      %92 = arith.maximumf %79, %80 : vector<1x128xf32>
      %93 = arith.maximumf %81, %82 : vector<1x128xf32>
      %94 = arith.maximumf %92, %93 : vector<1x128xf32>
      %95 = arith.subf %68, %65 : vector<1x128xf32>
      %96 = arith.subf %74, %71 : vector<1x128xf32>
      %97 = arith.mulf %95, %96 : vector<1x128xf32>
      %98 = arith.subf %88, %85 : vector<1x128xf32>
      %99 = arith.subf %94, %91 : vector<1x128xf32>
      %100 = arith.mulf %98, %99 : vector<1x128xf32>
      %101 = arith.minimumf %68, %88 : vector<1x128xf32>
      %102 = arith.maximumf %65, %85 : vector<1x128xf32>
      %103 = arith.subf %101, %102 : vector<1x128xf32>
      %cst_27 = arith.constant 0.000000e+00 : f32
      %104 = vector.broadcast %cst_27 : f32 to vector<1x128xf32>
      %105 = arith.maximumf %103, %104 : vector<1x128xf32>
      %106 = arith.minimumf %74, %94 : vector<1x128xf32>
      %107 = arith.maximumf %71, %91 : vector<1x128xf32>
      %108 = arith.subf %106, %107 : vector<1x128xf32>
      %cst_28 = arith.constant 0.000000e+00 : f32
      %109 = vector.broadcast %cst_28 : f32 to vector<1x128xf32>
      %110 = arith.maximumf %108, %109 : vector<1x128xf32>
      %111 = arith.mulf %105, %110 : vector<1x128xf32>
      %112 = arith.addf %97, %100 : vector<1x128xf32>
      %113 = arith.subf %112, %111 : vector<1x128xf32>
      %cst_29 = arith.constant 0.000000e+00 : f32
      %114 = vector.broadcast %cst_29 : f32 to vector<1x128xf32>
      %115 = arith.cmpf ogt, %113, %114 : vector<1x128xf32>
      %116 = arith.divf %111, %113 : vector<1x128xf32>
      %cst_30 = arith.constant 0.000000e+00 : f32
      %117 = vector.broadcast %cst_30 : f32 to vector<1x128xf32>
      %118 = arith.select %115, %116, %117 : vector<1x128xi1>, vector<1x128xf32>
      %119 = arith.maximumf %68, %88 : vector<1x128xf32>
      %120 = arith.minimumf %65, %85 : vector<1x128xf32>
      %121 = arith.subf %119, %120 : vector<1x128xf32>
      %122 = arith.maximumf %74, %94 : vector<1x128xf32>
      %123 = arith.minimumf %71, %91 : vector<1x128xf32>
      %124 = arith.subf %122, %123 : vector<1x128xf32>
      %125 = arith.mulf %121, %124 : vector<1x128xf32>
      %cst_31 = arith.constant 0.000000e+00 : f32
      %126 = vector.broadcast %cst_31 : f32 to vector<1x128xf32>
      %127 = arith.cmpf ogt, %125, %126 : vector<1x128xf32>
      %128 = arith.subf %125, %113 : vector<1x128xf32>
      %129 = arith.divf %128, %125 : vector<1x128xf32>
      %130 = arith.subf %118, %129 : vector<1x128xf32>
      %131 = arith.select %127, %130, %118 : vector<1x128xi1>, vector<1x128xf32>
      %132 = arith.mulf %131, %45 : vector<1x128xf32>
      %133 = vector.shape_cast %132 : vector<1x128xf32> to vector<1x1x128xf32>
      %cst_32 = arith.constant dense<0.000000e+00> : vector<1xf32>
      %134 = vector.multi_reduction <add>, %133, %cst_32 [1, 2] : vector<1x1x128xf32> to vector<1xf32>
      %135 = vector.shape_cast %134 : vector<1xf32> to vector<1x1x1xf32>
      %136 = vector.extract %135[0, 0, 0] : f32 from vector<1x1x1xf32>
      %137 = vector.broadcast %136 : f32 to vector<1x1xf32>
      %138 = arith.mulf %118, %45 : vector<1x128xf32>
      %139 = math.absf %44 : vector<1x128xf32>
      %cst_33 = arith.constant 0.000000e+00 : f32
      %140 = vector.broadcast %cst_33 : f32 to vector<1x128xf32>
      %141 = arith.subf %140, %139 : vector<1x128xf32>
      %142 = math.exp %141 : vector<1x128xf32>
      %143 = math.log1p %142 : vector<1x128xf32>
      %cst_34 = arith.constant 1.000000e+00 : f32
      %144 = vector.broadcast %cst_34 : f32 to vector<1x128xf32>
      %145 = arith.addf %144, %142 : vector<1x128xf32>
      %146 = tpu.reciprocal %145 {approx = true} : vector<1x128xf32> -> vector<1x128xf32>
      %cst_35 = arith.constant 0.000000e+00 : f32
      %147 = vector.broadcast %cst_35 : f32 to vector<1x128xf32>
      %148 = arith.cmpf oge, %44, %147 : vector<1x128xf32>
      %149 = arith.mulf %142, %146 : vector<1x128xf32>
      %150 = arith.select %148, %146, %149 : vector<1x128xi1>, vector<1x128xf32>
      %cst_36 = arith.constant 0.000000e+00 : f32
      %151 = vector.broadcast %cst_36 : f32 to vector<1x128xf32>
      %152 = arith.maximumf %44, %151 : vector<1x128xf32>
      %153 = arith.addf %152, %143 : vector<1x128xf32>
      %154 = arith.subf %152, %44 : vector<1x128xf32>
      %155 = arith.addf %154, %143 : vector<1x128xf32>
      %cst_37 = arith.constant 1.000000e+00 : f32
      %156 = vector.broadcast %cst_37 : f32 to vector<1x128xf32>
      %157 = arith.mulf %156, %150 : vector<1x128xf32>
      %158 = arith.mulf %157, %150 : vector<1x128xf32>
      %159 = arith.mulf %158, %153 : vector<1x128xf32>
      %cst_38 = arith.constant 2.000000e-01 : f32
      %160 = vector.broadcast %cst_38 : f32 to vector<1x128xf32>
      %161 = arith.mulf %160, %155 : vector<1x128xf32>
      %cst_39 = arith.constant 1.000000e+00 : f32
      %162 = vector.broadcast %cst_39 : f32 to vector<1x128xf32>
      %163 = arith.subf %162, %150 : vector<1x128xf32>
      %cst_40 = arith.constant 1.000000e+00 : f32
      %164 = vector.broadcast %cst_40 : f32 to vector<1x128xf32>
      %165 = arith.mulf %164, %163 : vector<1x128xf32>
      %166 = arith.mulf %165, %163 : vector<1x128xf32>
      %167 = arith.mulf %161, %166 : vector<1x128xf32>
      %cst_41 = arith.constant 8.000000e-01 : f32
      %168 = vector.broadcast %cst_41 : f32 to vector<1x128xf32>
      %169 = arith.mulf %168, %159 : vector<1x128xf32>
      %170 = arith.subf %167, %169 : vector<1x128xf32>
      %171 = arith.mulf %44, %138 : vector<1x128xf32>
      %172 = arith.subf %152, %171 : vector<1x128xf32>
      %173 = arith.addf %172, %143 : vector<1x128xf32>
      %174 = arith.mulf %138, %173 : vector<1x128xf32>
      %cst_42 = arith.constant 2.000000e-01 : f32
      %175 = vector.broadcast %cst_42 : f32 to vector<1x128xf32>
      %176 = arith.mulf %175, %159 : vector<1x128xf32>
      %177 = arith.subf %174, %176 : vector<1x128xf32>
      %178 = arith.mulf %170, %45 : vector<1x128xf32>
      %179 = vector.shape_cast %178 : vector<1x128xf32> to vector<1x1x128xf32>
      %cst_43 = arith.constant dense<0.000000e+00> : vector<1xf32>
      %180 = vector.multi_reduction <add>, %179, %cst_43 [1, 2] : vector<1x1x128xf32> to vector<1xf32>
      %181 = vector.shape_cast %180 : vector<1xf32> to vector<1x1x1xf32>
      %182 = vector.extract %181[0, 0, 0] : f32 from vector<1x1x1xf32>
      %183 = vector.broadcast %182 : f32 to vector<1x1xf32>
      %184 = arith.mulf %177, %45 : vector<1x128xf32>
      %185 = vector.shape_cast %184 : vector<1x128xf32> to vector<1x1x128xf32>
      %cst_44 = arith.constant dense<0.000000e+00> : vector<1xf32>
      %186 = vector.multi_reduction <add>, %185, %cst_44 [1, 2] : vector<1x1x128xf32> to vector<1xf32>
      %187 = vector.shape_cast %186 : vector<1xf32> to vector<1x1x1xf32>
      %188 = vector.extract %187[0, 0, 0] : f32 from vector<1x1x1xf32>
      %189 = vector.broadcast %188 : f32 to vector<1x1xf32>
      %cst_45 = arith.constant 8.000000e-01 : f32
      %190 = vector.broadcast %cst_45 : f32 to vector<1x1xf32>
      %191 = arith.mulf %190, %37 : vector<1x1xf32>
      %192 = arith.addf %191, %183 : vector<1x1xf32>
      %cst_46 = arith.constant 2.000000e-01 : f32
      %193 = vector.broadcast %cst_46 : f32 to vector<1x1xf32>
      %194 = arith.mulf %193, %37 : vector<1x1xf32>
      %195 = arith.addf %194, %189 : vector<1x1xf32>
      %196 = tpu.iota {dimensions = array<i32: 0>} : vector<8x128xi32>
      %197 = tpu.iota {dimensions = array<i32: 1>} : vector<8x128xi32>
      %c0_i32_47 = arith.constant 0 : i32
      %198 = vector.broadcast %c0_i32_47 : i32 to vector<8x128xi32>
      %199 = arith.cmpi eq, %196, %198 : vector<8x128xi32>
      %cst_48 = arith.constant 0.000000e+00 : f32
      %200 = vector.broadcast %cst_48 : f32 to vector<8x128xf32>
      %c0_i32_49 = arith.constant 0 : i32
      %201 = vector.broadcast %c0_i32_49 : i32 to vector<8x128xi32>
      %202 = arith.cmpi eq, %197, %201 : vector<8x128xi32>
      %203 = arith.andi %199, %202 : vector<8x128xi1>
      %c1_i32 = arith.constant 1 : i32
      %204 = vector.broadcast %c1_i32 : i32 to vector<8x128xi32>
      %205 = arith.cmpi eq, %197, %204 : vector<8x128xi32>
      %206 = arith.andi %199, %205 : vector<8x128xi1>
      %c2_i32 = arith.constant 2 : i32
      %207 = vector.broadcast %c2_i32 : i32 to vector<8x128xi32>
      %208 = arith.cmpi eq, %197, %207 : vector<8x128xi32>
      %209 = arith.andi %199, %208 : vector<8x128xi1>
      %c3_i32 = arith.constant 3 : i32
      %210 = vector.broadcast %c3_i32 : i32 to vector<8x128xi32>
      %211 = arith.cmpi eq, %197, %210 : vector<8x128xi32>
      %212 = arith.andi %199, %211 : vector<8x128xi1>
      %213 = vector.shape_cast %137 : vector<1x1xf32> to vector<1x1xf32>
      %214 = vector.broadcast %213 : vector<1x1xf32> to vector<8x128xf32>
      %215 = arith.select %212, %214, %200 : vector<8x128xi1>, vector<8x128xf32>
      %216 = vector.shape_cast %54 : vector<1x1xf32> to vector<1x1xf32>
      %217 = vector.broadcast %216 : vector<1x1xf32> to vector<8x128xf32>
      %218 = arith.select %209, %217, %215 : vector<8x128xi1>, vector<8x128xf32>
      %219 = vector.shape_cast %195 : vector<1x1xf32> to vector<1x1xf32>
      %220 = vector.broadcast %219 : vector<1x1xf32> to vector<8x128xf32>
      %221 = arith.select %206, %220, %218 : vector<8x128xi1>, vector<8x128xf32>
      %222 = vector.shape_cast %192 : vector<1x1xf32> to vector<1x1xf32>
      %223 = vector.broadcast %222 : vector<1x1xf32> to vector<8x128xf32>
      %224 = arith.select %203, %223, %221 : vector<8x128xi1>, vector<8x128xf32>
      %c0_50 = arith.constant 0 : index
      %c0_51 = arith.constant 0 : index
      %c0_52 = arith.constant 0 : index
      %225 = vector.load %arg6[%c0_50, %c0_51, %c0_52] : memref<1x8x128xf32, #tpu.memory_space<vmem>>, vector<1x8x128xf32>
      %226 = vector.shape_cast %225 : vector<1x8x128xf32> to vector<8x128xf32>
      %227 = vector.shape_cast %224 : vector<8x128xf32> to vector<1x8x128xf32>
      tpu.vector_store %arg6[%c0_50, %c0_51, %c0_52], %227 {strides = array<i32>} : memref<1x8x128xf32, #tpu.memory_space<vmem>>, vector<1x8x128xf32>,
    } else {
    }
    return
  }
  func.func @transform_0(%arg0: i32, %arg1: i32) -> (i32, i32, i32) {
    %c0_i32 = arith.constant 0 : i32
    %c0_i32_0 = arith.constant 0 : i32
    return %arg0, %arg1, %c0_i32 : i32, i32, i32
  }
  func.func @transform_1(%arg0: i32, %arg1: i32) -> (i32, i32, i32) {
    %c0_i32 = arith.constant 0 : i32
    %c0_i32_0 = arith.constant 0 : i32
    %c0_i32_1 = arith.constant 0 : i32
    return %arg0, %c0_i32, %c0_i32_0 : i32, i32, i32
  }
  func.func @transform_2(%arg0: i32, %arg1: i32) -> (i32, i32, i32) {
    %c0_i32 = arith.constant 0 : i32
    %c0_i32_0 = arith.constant 0 : i32
    %c0_i32_1 = arith.constant 0 : i32
    return %arg0, %c0_i32, %c0_i32_0 : i32, i32, i32
  }
  func.func @transform_3(%arg0: i32, %arg1: i32) -> (i32, i32, i32) {
    %c0_i32 = arith.constant 0 : i32
    %c0_i32_0 = arith.constant 0 : i32
    %c0_i32_1 = arith.constant 0 : i32
    return %arg0, %c0_i32, %c0_i32_0 : i32, i32, i32
  }
  func.func @transform_4(%arg0: i32, %arg1: i32) -> (i32, i32, i32) {
    %c0_i32 = arith.constant 0 : i32
    %c0_i32_0 = arith.constant 0 : i32
    %c0_i32_1 = arith.constant 0 : i32
    return %arg0, %c0_i32, %c0_i32_0 : i32, i32, i32
  }
}

</mosaic_0001>

<llo_original>
// kernel: tpu_custom_call.1
$region0: #{tpu_custom_call.1}
  #allocation0 [shape = 'u32[]', space=smem, size = 0x4, offset = 0x4, fixed_abs, tag = 'smem constant byte address 0x4 - core index']
  #allocation1 [shape = 'u32[144,128]{1,0:T(1,128)}', space=vmem, size = 0x12000, scoped, tag = 'internal scratch']
  #allocation2 [shape = 'f32[1,128]{1,0:T(1,128)}', space=vmem, size = 0x200, scoped, tag = 'scratch operand']
  %s0 = inlined_call_operand.hbm [shape: f32[3,16,128], index: 0, kind: input, shape index: {}]
  %s1 = inlined_call_operand.hbm [shape: f32[3,8,128], index: 1, kind: input, shape index: {}]
  %s2 = inlined_call_operand.hbm [shape: f32[3,8,128], index: 2, kind: input, shape index: {}]
  %s3 = inlined_call_operand.hbm [shape: f32[3,8,128], index: 3, kind: input, shape index: {}]
  %s4 = inlined_call_operand.hbm [shape: f32[3,8,128], index: 4, kind: output, shape index: {}]
  %s5 = sld [smem:[#allocation0]]
  $region73: #{tpu_custom_call.1} parent=0
    _
  %s7 = ssub.s32 1, %s5
  %s8 = scalar_select 0, %s7, %s5
  $region1: #{tpu_custom_call.1} parent=0
    #allocation3 [shape = 'u8[16384]{0}', space=vmem, size = 0x4000, scoped, tag = 'input window, operand 0']
    #allocation4 [shape = 's32[2]{0}', space=sflag, size = 0x8, scoped, tag = 'scoped memory for tpu_custom_call.1']
    #allocation5 [shape = 's32[2]{0}', space=sflag, size = 0x8, scoped, tag = 'scoped memory for tpu_custom_call.1']
    #allocation6 [shape = 'u8[8192]{0}', space=vmem, size = 0x2000, scoped, tag = 'input window, operand 1']
    #allocation7 [shape = 's32[2]{0}', space=sflag, size = 0x8, scoped, tag = 'scoped memory for tpu_custom_call.1']
    #allocation8 [shape = 'u8[8192]{0}', space=vmem, size = 0x2000, scoped, tag = 'input window, operand 2']
    #allocation9 [shape = 'u8[8192]{0}', space=vmem, size = 0x2000, scoped, tag = 'input window, operand 3']
    #allocation10 [shape = 's32[2]{0}', space=sflag, size = 0x8, scoped, tag = 'scoped memory for tpu_custom_call.1']
    #allocation11 [shape = 'u8[8192]{0}', space=vmem, size = 0x2000, scoped, tag = 'output window, operand 0']
    %9 = vsyncpa [#allocation4], 0
    %s10 = scalar_lea.sflag [#allocation4], 1
    %11 = vsyncpa %s10, 0
    %12 = vsyncpa [#allocation7], 0
    %s13 = scalar_lea.sflag [#allocation7], 1
    %14 = vsyncpa %s13, 0
    %15 = vsyncpa [#allocation10], 0
    %s16 = scalar_lea.sflag [#allocation10], 1
    %17 = vsyncpa %s16, 0
    %18 = vsyncpa [#allocation5], 0
    %s19 = scalar_lea.sflag [#allocation5], 1
    %20 = vsyncpa %s19, 0
    loop: start=0, step=1, limit=5
    $region2: #{tpu_custom_call.1} parent=1 // loop_pre_header
      _
    $region3: #{tpu_custom_call.1} parent=1 // loop_header
      %s22 = sphi 0, %s26
      %p23 = scmp.ge.s32.totalorder %s22, 5
      %s29 = sphi 0, %s41
      %s30 = sphi 0, %s37
      %s31 = sphi 0, %s29
      %s32 = sphi 0, %s30
      %s33 = sphi 0, %s31
      %s34 = sphi 0, %s32
      %s46 = sphi 0, %s48
      %s49 = sphi 0, %s46
      %s50 = sphi 0, %s49
      %s66 = sphi 0, %s50
      %s72 = sphi 0, %s74
      %s75 = sphi 0, %s72
      %s76 = sphi 0, %s75
      %s92 = sphi 0, %s76
      %s98 = sphi 0, %s100
      %s101 = sphi 0, %s98
      %s102 = sphi 0, %s101
      %s118 = sphi 0, %s102
      %s124 = sphi 0, %s126
      %s127 = sphi 0, %s124
      %s128 = sphi 0, %s127
      %s144 = sphi 0, %s128
      %s150 = sphi 0, %s152
      %s153 = sphi 0, %s150
      %s154 = sphi 0, %s153
      %s170 = sphi 0, %s154
    $region4: #{tpu_custom_call.1} parent=1 // loop_header_branch
      %25 = sbr.rel (%p23) target = $region8
    $region5: #{tpu_custom_call.1} parent=1 // loop_body
      %s27 = ssub.s32 %s22, 1
      %s28 = ssub.s32 %s22, 2
      %s35 = sadd.s32 1, %s30
      %p36 = scmp.ge.s32.totalorder %s35, 1
      %s37 = scalar_select %p36, 0, %s35
      %s38 = sadd.s32 1, %s29
      %s39 = scalar_select %p36, %s38, %s29
      %p40 = scmp.ge.s32.totalorder %s39, 3
      %s41 = scalar_select %p40, 0, %s39
      %s42 = ssub.s32 %s29, %s41
      %s43 = ssub.s32 %s30, %s37
      %s44 = sor.u32 %s42, %s43
      %p45 = scmp.eq.s32.totalorder %s44, 0
      %s47 = sadd.s32 %s46, 1
      %s48 = scalar_select %p45, %s46, %s47
      %p51 = pneg %p45
      %p52 = scmp.eq.s32.totalorder %s22, 2
      %p53 = por %p51, %p52
      %p54 = scmp.ne.s32.totalorder %s46, %s49
      %p55 = scmp.eq.s32.totalorder %s22, 0
      %p56 = por %p54, %p55
      %p57 = scmp.ne.s32.totalorder %s46, %s49
      %p58 = scmp.eq.s32.totalorder %s27, 2
      %p59 = por %p57, %p58
      %p60 = scmp.ne.s32.totalorder %s49, %s50
      %p61 = scmp.eq.s32.totalorder %s27, 0
      %p62 = por %p60, %p61
      %p63 = scmp.ne.s32.totalorder %s49, %s50
      %p64 = scmp.eq.s32.totalorder %s28, 2
      %p65 = por %p63, %p64
      %p67 = scmp.ne.s32.totalorder %s50, %s66
      %p68 = scmp.eq.s32.totalorder %s28, 0
      %p69 = por %p67, %p68
      %s70 = ssub.s32 %s29, %s41
      %p71 = scmp.eq.s32.totalorder %s70, 0
      %s73 = sadd.s32 %s72, 1
      %s74 = scalar_select %p71, %s72, %s73
      %p77 = pneg %p71
      %p78 = scmp.eq.s32.totalorder %s22, 2
      %p79 = por %p77, %p78
      %p80 = scmp.ne.s32.totalorder %s72, %s75
      %p81 = scmp.eq.s32.totalorder %s22, 0
      %p82 = por %p80, %p81
      %p83 = scmp.ne.s32.totalorder %s72, %s75
      %p84 = scmp.eq.s32.totalorder %s27, 2
      %p85 = por %p83, %p84
      %p86 = scmp.ne.s32.totalorder %s75, %s76
      %p87 = scmp.eq.s32.totalorder %s27, 0
      %p88 = por %p86, %p87
      %p89 = scmp.ne.s32.totalorder %s75, %s76
      %p90 = scmp.eq.s32.totalorder %s28, 2
      %p91 = por %p89, %p90
      %p93 = scmp.ne.s32.totalorder %s76, %s92
      %p94 = scmp.eq.s32.totalorder %s28, 0
      %p95 = por %p93, %p94
      %s96 = ssub.s32 %s29, %s41
      %p97 = scmp.eq.s32.totalorder %s96, 0
      %s99 = sadd.s32 %s98, 1
      %s100 = scalar_select %p97, %s98, %s99
      %p103 = pneg %p97
      %p104 = scmp.eq.s32.totalorder %s22, 2
      %p105 = por %p103, %p104
      %p106 = scmp.ne.s32.totalorder %s98, %s101
      %p107 = scmp.eq.s32.totalorder %s22, 0
      %p108 = por %p106, %p107
      %p109 = scmp.ne.s32.totalorder %s98, %s101
      %p110 = scmp.eq.s32.totalorder %s27, 2
      %p111 = por %p109, %p110
      %p112 = scmp.ne.s32.totalorder %s101, %s102
      %p113 = scmp.eq.s32.totalorder %s27, 0
      %p114 = por %p112, %p113
      %p115 = scmp.ne.s32.totalorder %s101, %s102
      %p116 = scmp.eq.s32.totalorder %s28, 2
      %p117 = por %p115, %p116
      %p119 = scmp.ne.s32.totalorder %s102, %s118
      %p120 = scmp.eq.s32.totalorder %s28, 0
      %p121 = por %p119, %p120
      %s122 = ssub.s32 %s29, %s41
      %p123 = scmp.eq.s32.totalorder %s122, 0
      %s125 = sadd.s32 %s124, 1
      %s126 = scalar_select %p123, %s124, %s125
      %p129 = pneg %p123
      %p130 = scmp.eq.s32.totalorder %s22, 2
      %p131 = por %p129, %p130
      %p132 = scmp.ne.s32.totalorder %s124, %s127
      %p133 = scmp.eq.s32.totalorder %s22, 0
      %p134 = por %p132, %p133
      %p135 = scmp.ne.s32.totalorder %s124, %s127
      %p136 = scmp.eq.s32.totalorder %s27, 2
      %p137 = por %p135, %p136
      %p138 = scmp.ne.s32.totalorder %s127, %s128
      %p139 = scmp.eq.s32.totalorder %s27, 0
      %p140 = por %p138, %p139
      %p141 = scmp.ne.s32.totalorder %s127, %s128
      %p142 = scmp.eq.s32.totalorder %s28, 2
      %p143 = por %p141, %p142
      %p145 = scmp.ne.s32.totalorder %s128, %s144
      %p146 = scmp.eq.s32.totalorder %s28, 0
      %p147 = por %p145, %p146
      %s148 = ssub.s32 %s29, %s41
      %p149 = scmp.eq.s32.totalorder %s148, 0
      %s151 = sadd.s32 %s150, 1
      %s152 = scalar_select %p149, %s150, %s151
      %p155 = pneg %p149
      %p156 = scmp.eq.s32.totalorder %s22, 2
      %p157 = por %p155, %p156
      %p158 = scmp.ne.s32.totalorder %s150, %s153
      %p159 = scmp.eq.s32.totalorder %s22, 0
      %p160 = por %p158, %p159
      %p161 = scmp.ne.s32.totalorder %s150, %s153
      %p162 = scmp.eq.s32.totalorder %s27, 2
      %p163 = por %p161, %p162
      %p164 = scmp.ne.s32.totalorder %s153, %s154
      %p165 = scmp.eq.s32.totalorder %s27, 0
      %p166 = por %p164, %p165
      %p167 = scmp.ne.s32.totalorder %s153, %s154
      %p168 = scmp.eq.s32.totalorder %s28, 2
      %p169 = por %p167, %p168
      %p171 = scmp.ne.s32.totalorder %s154, %s170
      %p172 = scmp.eq.s32.totalorder %s28, 0
      %p173 = por %p171, %p172
      %p174 = scmp.le.s32.totalorder 1, %s22
      %p175 = scmp.lt.s32.totalorder %s22, 4
      %p176 = pnand %p174, %p175
      %p177 = pneg %p176
      // Predicated region
      $region9: #{tpu_custom_call.1} parent=5 // pred_check
        _
      $region10: #{tpu_custom_call.1} parent=5 // pred_check_branch
        %179 = sbr.rel (%p176) target = $region12
      $region11: #{tpu_custom_call.1} parent=5 // pred_region
        %s180 = ssub.s32 %s22, 1
      $region12: #{tpu_custom_call.1} parent=5 // pred_fallthru
        _
      %p181 = scmp.lt.s32.totalorder %s22, 3
      // Predicated region
      $region13: #{tpu_custom_call.1} parent=5 // pred_check
        %p182 = pneg %p181
      $region14: #{tpu_custom_call.1} parent=5 // pred_check_branch
        %184 = sbr.rel (%p182) target = $region16
      $region15: #{tpu_custom_call.1} parent=5 // pred_region
        // Predicated region
        $region17: #{tpu_custom_call.1} parent=15 // pred_check
          %p185 = pneg %p56
        $region18: #{tpu_custom_call.1} parent=15 // pred_check_branch
          %187 = sbr.rel (%p185) target = $region20
        $region19: #{tpu_custom_call.1} parent=15 // pred_region
          %s188 = sand.u32 %s46, 1
          %s189 = scalar_lea.sflag [#allocation4], %s188
          %s190 = sand.u32 %s46, 1
          %s191 = smul.addr %s190, 16
          %s192 = scalar_lea.vmem [#allocation3], %s191
          %s193 = smul.u32 2, %s30
          %s195 = ssub.s32 256, 256
          %196 = vsyncadd %s189, %s195
          %s197 = smul.addr %s29, 2
          %s198 = sadd.s32 %s193, %s197
          %s199 = smul.addr %s198, 128
          %s200 = scalar_lea.hbm %s0, %s199
          %s201 = sshll.u32 %s192, 4
          %s202 = int_to_ptr.vmem [resolvable:$true] %s201
          %207 = dma.hbm_to_vmem [thread:$0]  %s200, 256, %s202, %s189, 128, 128, 8
        $region20: #{tpu_custom_call.1} parent=15 // pred_fallthru
          _
        // Predicated region
        $region21: #{tpu_custom_call.1} parent=15 // pred_check
          %p208 = pneg %p82
        $region22: #{tpu_custom_call.1} parent=15 // pred_check_branch
          %210 = sbr.rel (%p208) target = $region24
        $region23: #{tpu_custom_call.1} parent=15 // pred_region
          %s211 = sand.u32 %s22, 1
          %s212 = scalar_lea.sflag [#allocation7], %s211
          %s213 = sand.u32 %s72, 1
          %s214 = smul.addr %s213, 8
          %s215 = scalar_lea.vmem [#allocation6], %s214
          %s217 = ssub.s32 128, 128
          %218 = vsyncadd %s212, %s217
          %s219 = smul.addr %s29, 128
          %s220 = scalar_lea.hbm %s1, %s219
          %s222 = sshll.u32 %s215, 4
          %s223 = int_to_ptr.vmem [resolvable:$true] %s222
          %225 = dma.hbm_to_vmem [thread:$0]  %s220, 128, %s223, %s212
        $region24: #{tpu_custom_call.1} parent=15 // pred_fallthru
          _
        // Predicated region
        $region25: #{tpu_custom_call.1} parent=15 // pred_check
          %p226 = pneg %p108
        $region26: #{tpu_custom_call.1} parent=15 // pred_check_branch
          %228 = sbr.rel (%p226) target = $region28
        $region27: #{tpu_custom_call.1} parent=15 // pred_region
          %s229 = sand.u32 %s22, 1
          %s230 = scalar_lea.sflag [#allocation7], %s229
          %s231 = sand.u32 %s98, 1
          %s232 = smul.addr %s231, 8
          %s233 = scalar_lea.vmem [#allocation8], %s232
          %s235 = ssub.s32 128, 128
          %236 = vsyncadd %s230, %s235
          %s237 = smul.addr %s29, 128
          %s238 = scalar_lea.hbm %s2, %s237
          %s240 = sshll.u32 %s233, 4
          %s241 = int_to_ptr.vmem [resolvable:$true] %s240
          %243 = dma.hbm_to_vmem [thread:$0]  %s238, 128, %s241, %s230
        $region28: #{tpu_custom_call.1} parent=15 // pred_fallthru
          _
        // Predicated region
        $region29: #{tpu_custom_call.1} parent=15 // pred_check
          %p244 = pneg %p134
        $region30: #{tpu_custom_call.1} parent=15 // pred_check_branch
          %246 = sbr.rel (%p244) target = $region32
        $region31: #{tpu_custom_call.1} parent=15 // pred_region
          %s247 = sand.u32 %s124, 1
          %s248 = scalar_lea.sflag [#allocation10], %s247
          %s249 = sand.u32 %s124, 1
          %s250 = smul.addr %s249, 8
          %s251 = scalar_lea.vmem [#allocation9], %s250
          %s253 = ssub.s32 128, 128
          %254 = vsyncadd %s248, %s253
          %s255 = smul.addr %s29, 128
          %s256 = scalar_lea.hbm %s3, %s255
          %s258 = sshll.u32 %s251, 4
          %s259 = int_to_ptr.vmem [resolvable:$true] %s258
          %261 = dma.hbm_to_vmem [thread:$0]  %s256, 128, %s259, %s248
        $region32: #{tpu_custom_call.1} parent=15 // pred_fallthru
          _
      $region16: #{tpu_custom_call.1} parent=5 // pred_fallthru
        _
      %p262 = scmp.le.s32.totalorder 1, %s22
      %p263 = scmp.lt.s32.totalorder %s22, 4
      %p264 = pnand %p262, %p263
      %p265 = pneg %p264
      // Predicated region
      $region33: #{tpu_custom_call.1} parent=5 // pred_check
        _
      $region34: #{tpu_custom_call.1} parent=5 // pred_check_branch
        %267 = sbr.rel (%p264) target = $region36
      $region35: #{tpu_custom_call.1} parent=5 // pred_region
        %s268 = ssub.s32 %s22, 1
        %s269 = sand.u32 %s49, 1
        %s270 = scalar_lea.sflag [#allocation4], %s269
        %s271 = sand.u32 %s49, 1
        %s272 = smul.addr %s271, 16
        %s273 = scalar_lea.vmem [#allocation3], %s272
        // Predicated region
        $region37: #{tpu_custom_call.1} parent=35 // pred_check
          %p274 = pneg %p62
        $region38: #{tpu_custom_call.1} parent=35 // pred_check_branch
          %276 = sbr.rel (%p274) target = $region40
        $region39: #{tpu_custom_call.1} parent=35 // pred_region
          %277 = dma.done %s270, 256
        $region40: #{tpu_custom_call.1} parent=35 // pred_fallthru
          _
        %s278 = sand.u32 %s27, 1
        %s279 = scalar_lea.sflag [#allocation7], %s278
        %s280 = sand.u32 %s75, 1
        %s281 = smul.addr %s280, 8
        %s282 = scalar_lea.vmem [#allocation6], %s281
        // Predicated region
        $region41: #{tpu_custom_call.1} parent=35 // pred_check
          %p283 = pneg %p88
        $region42: #{tpu_custom_call.1} parent=35 // pred_check_branch
          %285 = sbr.rel (%p283) target = $region44
        $region43: #{tpu_custom_call.1} parent=35 // pred_region
          %286 = dma.done %s279, 128
        $region44: #{tpu_custom_call.1} parent=35 // pred_fallthru
          _
        %s287 = sand.u32 %s27, 1
        %s288 = scalar_lea.sflag [#allocation7], %s287
        %s289 = sand.u32 %s101, 1
        %s290 = smul.addr %s289, 8
        %s291 = scalar_lea.vmem [#allocation8], %s290
        // Predicated region
        $region45: #{tpu_custom_call.1} parent=35 // pred_check
          %p292 = pneg %p114
        $region46: #{tpu_custom_call.1} parent=35 // pred_check_branch
          %294 = sbr.rel (%p292) target = $region48
        $region47: #{tpu_custom_call.1} parent=35 // pred_region
          %295 = dma.done %s288, 128
        $region48: #{tpu_custom_call.1} parent=35 // pred_fallthru
          _
        %s296 = sand.u32 %s127, 1
        %s297 = scalar_lea.sflag [#allocation10], %s296
        %s298 = sand.u32 %s127, 1
        %s299 = smul.addr %s298, 8
        %s300 = scalar_lea.vmem [#allocation9], %s299
        // Predicated region
        $region49: #{tpu_custom_call.1} parent=35 // pred_check
          %p301 = pneg %p140
        $region50: #{tpu_custom_call.1} parent=35 // pred_check_branch
          %303 = sbr.rel (%p301) target = $region52
        $region51: #{tpu_custom_call.1} parent=35 // pred_region
          %304 = dma.done %s297, 128
        $region52: #{tpu_custom_call.1} parent=35 // pred_fallthru
          _
        %s305 = sand.u32 %s49, 1
        %s306 = scalar_lea.sflag [#allocation4], %s305
        %s307 = sand.u32 %s49, 1
        %s308 = smul.addr %s307, 16
        %s309 = scalar_lea.vmem [#allocation3], %s308
        %p310 = pneg %p62
        %p311 = pneg %p59
        %s312 = sand.u32 %s27, 1
        %s313 = scalar_lea.sflag [#allocation7], %s312
        %s314 = sand.u32 %s75, 1
        %s315 = smul.addr %s314, 8
        %s316 = scalar_lea.vmem [#allocation6], %s315
        %p317 = pneg %p88
        %p318 = pneg %p85
        %s319 = sand.u32 %s27, 1
        %s320 = scalar_lea.sflag [#allocation7], %s319
        %s321 = sand.u32 %s101, 1
        %s322 = smul.addr %s321, 8
        %s323 = scalar_lea.vmem [#allocation8], %s322
        %p324 = pneg %p114
        %p325 = pneg %p111
        %s326 = sand.u32 %s127, 1
        %s327 = scalar_lea.sflag [#allocation10], %s326
        %s328 = sand.u32 %s127, 1
        %s329 = smul.addr %s328, 8
        %s330 = scalar_lea.vmem [#allocation9], %s329
        %p331 = pneg %p140
        %p332 = pneg %p137
        %p333 = pneg %p166
        %p334 = pneg %p163
        %s335 = sand.u32 %s153, 1
        %s336 = scalar_lea.sflag [#allocation5], %s335
        %s337 = sand.u32 %s153, 1
        %s338 = smul.addr %s337, 8
        %s339 = scalar_lea.vmem [#allocation11], %s338
        %s340 = smul.u32 2, %s32
        %p341 = scmp.eq.s32.totalorder %s32, 0
        // Predicated region
        $region53: #{tpu_custom_call.1} parent=35 // pred_check
          %p342 = pneg %p341
        $region54: #{tpu_custom_call.1} parent=35 // pred_check_branch
          %344 = sbr.rel (%p342) target = $region56
        $region55: #{tpu_custom_call.1} parent=35 // pred_region
          %345 = vst [vmem:[#allocation2] sm:$0x1] 0.0
        $region56: #{tpu_custom_call.1} parent=35 // pred_fallthru
          _
        %v346 = vld [vmem:[%s273] sm:$0xff]
        %v347 = vld [vmem:[%s273 + $0x8] sm:$0xff]
        %v348 = vand.u32 2147483647, %v346
        %v349 = vand.u32 2147483647, %v347
        %v350 = vsub.f32 0.0, %v348
        %v351 = vsub.f32 0.0, %v349
        %v352 = vmul.f32 %v350, 1.442695
        %v353 = vpow.pop %v352
        %v354 = vmul.f32 %v351, 1.442695
        %v355 = vpow.pop %v354
        %v356 = vadd.f32 %v353, 1.0
        %v357 = vlog2.pop %v356
        %v358 = vmul.f32 %v357, 0.6931472
        %v359 = vmul.f32 -0.5, %v353
        %v360 = vadd.f32 %v359, 1.0
        %v361 = vmul.f32 %v360, %v353
        %v362 = vand.u32 2147483647, %v353
        %vm363 = vcmp.lt.f32.partialorder %v362, 0.0004427343
        %v364 = vsel %vm363, %v361, %v358
        %v365 = vadd.f32 %v355, 1.0
        %v366 = vlog2.pop %v365
        %v367 = vmul.f32 %v366, 0.6931472
        %v368 = vmul.f32 -0.5, %v355
        %v369 = vadd.f32 %v368, 1.0
        %v370 = vmul.f32 %v369, %v355
        %v371 = vand.u32 2147483647, %v355
        %vm372 = vcmp.lt.f32.partialorder %v371, 0.0004427343
        %v373 = vsel %vm372, %v370, %v367
        %v374 = vadd.f32 %v353, 1.0
        %v375 = vadd.f32 %v355, 1.0
        %v376 = vrcp.pop %v374
        %v377 = vrcp.pop %v375
        %vm378 = vcmp.ge.f32.partialorder %v346, 0.0
        %vm379 = vcmp.ge.f32.partialorder %v347, 0.0
        %v380 = vmul.f32 %v353, %v376
        %v381 = vmul.f32 %v355, %v377
        %v382 = vsel %vm378, %v376, %v380
        %v383 = vsel %vm379, %v377, %v381
        %v384 = vmax.f32 %v346, 0.0
        %v385 = vmax.f32 %v347, 0.0
        %v386 = vadd.f32 %v384, %v364
        %v387 = vadd.f32 %v385, %v373
        %v388 = vmul.f32 %v382, %v382
        %v389 = vmul.f32 %v383, %v383
        %v390 = vmul.f32 %v388, %v386
        %v391 = vmul.f32 %v389, %v387
        %v392 = vld [vmem:[#allocation2] sm:$0x1]
        %v393 = vadd.f32 %v390, %v391
        %v394 = vrot.slane %v393, 4
        %v395 = vadd.f32 %v393, %v394
        %v396 = vrot.slane %v395, 2
        %v397 = vadd.f32 %v395, %v396
        %v398 = vrot.slane %v397, 1
        %v399 = vadd.f32 %v397, %v398
        %v400 = vadd.f32 %v392, %v399
        %401 = vst [vmem:[#allocation2] sm:$0x1] %v400
        // Predicated region
        $region57: #{tpu_custom_call.1} parent=35 // pred_check
          %p402 = pneg %p341
        $region58: #{tpu_custom_call.1} parent=35 // pred_check_branch
          %404 = sbr.rel (%p402) target = $region60
        $region59: #{tpu_custom_call.1} parent=35 // pred_region
          %v405 = vld [vmem:[#allocation2] sm:$0x1]
          %vm406 = vcmask 1040384
          %v407 = vsel %vm406, %v405, 0.0
          %408 = vadd.xlane.f32.xlu0 %v407
          %v409 = vpop.xlane.xlu0 %408
          %v410 = vrot.slane %v409, 4
          %v411 = vadd.f32 %v409, %v410
          %v412 = vrot.slane %v411, 2
          %v413 = vadd.f32 %v411, %v412
          %v414 = vrot.slane %v413, 1
          %v415 = vadd.f32 %v413, %v414
          %s416 = vtos %v415
          %v417 = vstv %s416
          %v418 = vld [vmem:[%s282] sm:$0xff]
          %v419 = vld [vmem:[%s291] sm:$0xff]
          %v420 = vld [vmem:[%s300] sm:$0xff]
          %v421 = vsub.f32 %v418, %v419
          %v422 = vand.u32 2147483647, %v421
          %v423 = vlaneseq
          %v424 = vshrl.u32 %v423, 7
          %v425 = vsub.s32 1, %v424
          %v426 = vrot.slane %v420, %v425
          %v427 = vmul.f32 %v422, %v426
          %428 = vadd.xlane.f32.xlu0 %v427
          %v429 = vpop.xlane.xlu0 %428
          %v430 = vrot.slane %v429, 4
          %v431 = vadd.f32 %v429, %v430
          %v432 = vrot.slane %v431, 2
          %v433 = vadd.f32 %v431, %v432
          %v434 = vrot.slane %v433, 1
          %v435 = vadd.f32 %v433, %v434
          %s436 = vtos %v435
          %v438 = vrot.slane %v418, 2
          %v440 = vmin.f32 %v418, %v438
          %v442 = vrot.slane %v440, 4
          %v444 = vmin.f32 %v440, %v442
          %v445 = vmax.f32 %v418, %v438
          %v447 = vrot.slane %v445, 4
          %v449 = vmax.f32 %v445, %v447
          %v451 = vrot.slane %v419, 2
          %v453 = vmin.f32 %v419, %v451
          %v455 = vrot.slane %v453, 4
          %v457 = vmin.f32 %v453, %v455
          %v458 = vmax.f32 %v419, %v451
          %v460 = vrot.slane %v458, 4
          %v462 = vmax.f32 %v458, %v460
          %v463 = vsub.f32 %v449, %v444
          %v465 = vrot.slane %v463, 1
          %v467 = vmul.f32 %v463, %v465
          %v468 = vsub.f32 %v462, %v457
          %v470 = vrot.slane %v468, 1
          %v472 = vmul.f32 %v468, %v470
          %v473 = vmin.f32 %v449, %v462
          %v474 = vmax.f32 %v444, %v457
          %v475 = vsub.f32 %v473, %v474
          %v476 = vmax.f32 %v475, 0.0
          %v478 = vrot.slane %v476, 1
          %v480 = vmul.f32 %v476, %v478
          %v481 = vadd.f32 %v467, %v472
          %v482 = vsub.f32 %v481, %v480
          %vm483 = vcmp.gt.f32.partialorder %v482, 0.0
          %v484 = vrcp.pop %v482
          %v485 = vmul.f32 %v480, %v484
          %v486 = vsel %vm483, %v485, 0.0
          %v487 = vmax.f32 %v449, %v462
          %v488 = vmin.f32 %v444, %v457
          %v489 = vsub.f32 %v487, %v488
          %v491 = vrot.slane %v489, 1
          %v493 = vmul.f32 %v489, %v491
          %vm494 = vcmp.gt.f32.partialorder %v493, 0.0
          %v495 = vsub.f32 %v493, %v482
          %v496 = vrcp.pop %v493
          %v497 = vmul.f32 %v495, %v496
          %v498 = vsub.f32 %v486, %v497
          %v499 = vsel %vm494, %v498, %v486
          %v501 = vrot.slane %v420, 1
          %v503 = vmul.f32 %v499, %v501
          %v504 = vsel %vm406, %v503, 0.0
          %505 = vadd.xlane.f32.xlu0 %v504
          %v506 = vpop.xlane.xlu0 %505
          %v507 = vrot.slane %v506, 4
          %v508 = vadd.f32 %v506, %v507
          %v509 = vrot.slane %v508, 2
          %v510 = vadd.f32 %v508, %v509
          %v511 = vrot.slane %v510, 1
          %v512 = vadd.f32 %v510, %v511
          %s513 = vtos %v512
          %v514 = vmul.f32 %v486, %v501
          %v515 = vand.u32 2147483647, %v420
          %v516 = vsub.f32 0.0, %v515
          %v517 = vmul.f32 %v516, 1.442695
          %v518 = vpow.pop %v517
          %v519 = vadd.f32 %v518, 1.0
          %v520 = vlog2.pop %v519
          %v521 = vmul.f32 %v520, 0.6931472
          %v522 = vmul.f32 -0.5, %v518
          %v523 = vadd.f32 %v522, 1.0
          %v524 = vmul.f32 %v523, %v518
          %v525 = vand.u32 2147483647, %v518
          %vm526 = vcmp.lt.f32.partialorder %v525, 0.0004427343
          %v527 = vsel %vm526, %v524, %v521
          %v528 = vadd.f32 %v518, 1.0
          %v529 = vrcp.pop %v528
          %vm530 = vcmp.ge.f32.partialorder %v420, 0.0
          %v531 = vmul.f32 %v518, %v529
          %v532 = vsel %vm530, %v529, %v531
          %v533 = vmax.f32 %v420, 0.0
          %v534 = vadd.f32 %v533, %v527
          %v535 = vsub.f32 %v533, %v420
          %v536 = vadd.f32 %v535, %v527
          %v537 = vmul.f32 %v532, %v532
          %v538 = vmul.f32 %v537, %v534
          %v539 = vmul.f32 %v536, 0.2
          %v540 = vsub.f32 1.0, %v532
          %v541 = vmul.f32 %v540, %v540
          %v542 = vmul.f32 %v539, %v541
          %v543 = vmul.f32 %v538, 0.8
          %v544 = vsub.f32 %v542, %v543
          %v545 = vmul.f32 %v420, %v514
          %v546 = vsub.f32 %v533, %v545
          %v547 = vadd.f32 %v546, %v527
          %v548 = vmul.f32 %v514, %v547
          %v549 = vmul.f32 %v538, 0.2
          %v550 = vsub.f32 %v548, %v549
          %v551 = vmul.f32 %v544, %v501
          %v552 = vsel %vm406, %v551, 0.0
          %553 = vadd.xlane.f32.xlu0 %v552
          %v554 = vpop.xlane.xlu0 %553
          %v555 = vrot.slane %v554, 4
          %v556 = vadd.f32 %v554, %v555
          %v557 = vrot.slane %v556, 2
          %v558 = vadd.f32 %v556, %v557
          %v559 = vrot.slane %v558, 1
          %v560 = vadd.f32 %v558, %v559
          %s561 = vtos %v560
          %v562 = vstv %s561
          %v563 = vmul.f32 %v550, %v501
          %v564 = vsel %vm406, %v563, 0.0
          %565 = vadd.xlane.f32.xlu0 %v564
          %v566 = vpop.xlane.xlu0 %565
          %v567 = vrot.slane %v566, 4
          %v568 = vadd.f32 %v566, %v567
          %v569 = vrot.slane %v568, 2
          %v570 = vadd.f32 %v568, %v569
          %v571 = vrot.slane %v570, 1
          %v572 = vadd.f32 %v570, %v571
          %s573 = vtos %v572
          %v574 = vstv %s573
          %v575 = vmul.f32 %v417, 0.8
          %v576 = vadd.f32 %v575, %v562
          %v577 = vmul.f32 %v417, 0.2
          %v578 = vadd.f32 %v577, %v574
          %v579 = vlaneseq
          %v580 = vshrl.u32 %v579, 7
          %v581 = vlaneseq
          %v582 = vand.u32 %v581, 127
          %vm583 = vcmp.eq.s32.totalorder %v580, 0
          %vm584 = vcmp.eq.s32.totalorder %v582, 0
          %vm585 = vmand %vm583, %vm584
          %vm586 = vcmp.eq.s32.totalorder %v582, 1
          %vm587 = vmand %vm583, %vm586
          %vm588 = vcmp.eq.s32.totalorder %v582, 2
          %vm589 = vmand %vm583, %vm588
          %vm590 = vcmp.eq.s32.totalorder %v582, 3
          %vm591 = vmand %vm583, %vm590
          %v592 = vstv %s513
          %v593 = vsel %vm591, %v592, 0.0
          %v594 = vstv %s436
          %v595 = vsel %vm589, %v594, %v593
          %v596 = vsel %vm587, %v578, %v595
          %v597 = vsel %vm585, %v576, %v596
          %598 = vst [vmem:[%s339] sm:$0xff] %v597
        $region60: #{tpu_custom_call.1} parent=35 // pred_fallthru
          _
        %s599 = sand.u32 %s153, 1
        %s600 = scalar_lea.sflag [#allocation5], %s599
        %s601 = sand.u32 %s153, 1
        %s602 = smul.addr %s601, 8
        %s603 = scalar_lea.vmem [#allocation11], %s602
        // Predicated region
        $region61: #{tpu_custom_call.1} parent=35 // pred_check
          %p604 = pneg %p163
        $region62: #{tpu_custom_call.1} parent=35 // pred_check_branch
          %606 = sbr.rel (%p604) target = $region64
        $region63: #{tpu_custom_call.1} parent=35 // pred_region
          %s608 = ssub.s32 128, 128
          %609 = vsyncadd %s600, %s608
          %s610 = smul.addr %s31, 128
          %s611 = scalar_lea.hbm %s4, %s610
          %s613 = sshll.u32 %s603, 4
          %s614 = int_to_ptr.vmem [resolvable:$true] %s613
          %616 = dma.vmem_to_hbm [thread:$0]  %s614, 128, %s611, %s600
        $region64: #{tpu_custom_call.1} parent=35 // pred_fallthru
          _
      $region36: #{tpu_custom_call.1} parent=5 // pred_fallthru
        _
      %p617 = scmp.le.s32.totalorder 2, %s22
      // Predicated region
      $region65: #{tpu_custom_call.1} parent=5 // pred_check
        %p618 = pneg %p617
      $region66: #{tpu_custom_call.1} parent=5 // pred_check_branch
        %620 = sbr.rel (%p618) target = $region68
      $region67: #{tpu_custom_call.1} parent=5 // pred_region
        %s621 = ssub.s32 %s22, 2
        // Predicated region
        $region69: #{tpu_custom_call.1} parent=67 // pred_check
          %p622 = pneg %p169
        $region70: #{tpu_custom_call.1} parent=67 // pred_check_branch
          %624 = sbr.rel (%p622) target = $region72
        $region71: #{tpu_custom_call.1} parent=67 // pred_region
          %s625 = sand.u32 %s154, 1
          %s626 = scalar_lea.sflag [#allocation5], %s625
          %s627 = sand.u32 %s154, 1
          %s628 = smul.addr %s627, 8
          %s629 = scalar_lea.vmem [#allocation11], %s628
          %630 = dma.done %s626, 128
        $region72: #{tpu_custom_call.1} parent=67 // pred_fallthru
          _
      $region68: #{tpu_custom_call.1} parent=5 // pred_fallthru
        _
    $region6: #{tpu_custom_call.1} parent=1 // loop_footer
      %s26 = sadd.s32 1, %s22
    $region7: #{tpu_custom_call.1} parent=1 // loop_footer_branch
      %21 = sbr.rel target = $region3
    $region8: #{tpu_custom_call.1} parent=1 // loop_exit
      _
    %631 = vsyncpa [#allocation4], 1
    %s632 = scalar_lea.sflag [#allocation4], 1
    %633 = vsyncpa %s632, 1
    %634 = vsyncpa [#allocation7], 1
    %s635 = scalar_lea.sflag [#allocation7], 1
    %636 = vsyncpa %s635, 1
    %637 = vsyncpa [#allocation10], 1
    %s638 = scalar_lea.sflag [#allocation10], 1
    %639 = vsyncpa %s638, 1
    %640 = vsyncpa [#allocation5], 1
    %s641 = scalar_lea.sflag [#allocation5], 1
    %642 = vsyncpa %s641, 1

</llo_original>
